<compile_context>
chip_gen: v7x
topology: tpu7x:2x2x1
jax: 0.10.0
libtpu: 0.0.40
codegen_flags: <defaults>
</compile_context>

<pallas_src>
import functools

import jax
import jax.numpy as jnp
from jax import lax
from jax.experimental import pallas as pl
from jax.experimental.pallas import tpu as pltpu

LANES = 128
SUBLANE_ALIGN = 16                     # covers f32 (8,128) and bf16 (16,128) tiling
CHUNK_ROWS = 512                       # in-kernel sub-slab; temporaries stay in vregs/small VMEM
TARGET_BLOCK_BYTES = 4 * 1024 * 1024   # ~4 MiB per input per grid step (per pipeline buffer)
DEFAULT_NUM_SLICES = 2                 # fallback "parallel" split if TC count can't be queried


def _cdiv(a, b):
    return -(-a // b)


@functools.lru_cache(maxsize=None)
def _num_tensorcores():
    """Best-effort TensorCore-per-chip count (2 on v7x, 1 on v5e/v6e); falls back to 2."""
    try:
        info = pltpu.get_tpu_info()
    except Exception:
        return DEFAULT_NUM_SLICES
    for name in ("num_cores", "num_tensor_cores", "tensorcore_count", "cores_per_chip"):
        val = getattr(info, name, None)
        try:
            v = int(val)
        except (TypeError, ValueError):
            continue
        if 1 <= v <= 16:
            return v
    return DEFAULT_NUM_SLICES


def _make_dice_kernel(tile_rows, chunk_rows, tiles_per_slice, valid_elems, needs_mask):
    n_full = tile_rows // chunk_rows
    rem_rows = tile_rows - n_full * chunk_rows
    tile_elems = tile_rows * LANES

    def fold8(v, c_rows):
        # (c_rows, LANES) -> (8, LANES) per-lane partial sums. Reduction is only over
        # the non-minor axis: pure VPU adds, no cross-lane (XLU) work in the hot loop.
        full = (c_rows // 8) * 8
        acc = jnp.zeros((8, LANES), jnp.float32)
        if full:
            acc = acc + jnp.sum(v[:full].reshape(full // 8, 8, LANES), axis=0)
        if c_rows != full:  # ragged (<8 rows) leftover -- only for tiny odd-shaped inputs
            colsum = jnp.sum(v[full:], axis=0, keepdims=True)          # (1, LANES)
            row_ids = lax.broadcasted_iota(jnp.int32, (8, LANES), 0)
            acc = acc + jnp.where(row_ids == 0, colsum, 0.0)
        return acc

    def kernel(x_ref, t_ref, o_ref):
        s = pl.program_id(0)   # slice (parallel; shards across TCs on megacore chips)
        j = pl.program_id(1)   # tile within slice (arbitrary / reduction)

        @pl.when(j == 0)
        def _():
            o_ref[...] = jnp.zeros(o_ref.shape, o_ref.dtype)

        base_elem = (s * tiles_per_slice + j) * tile_elems   # element offset of this tile

        def chunk_partials(row_off, c_rows, masked):
            xs = x_ref[pl.ds(row_off, c_rows), :].astype(jnp.float32)
            ts = t_ref[pl.ds(row_off, c_rows), :].astype(jnp.float32)
            # sigmoid(x) = 1 / (1 + exp(-x)) via the EUP reciprocal fast path.
            # Clamp keeps exp finite (sigmoid(-30) ~ 9e-14, exact to f32 anyway); one
            # Newton step (2 VPU ops, free under the DMA) restores full f32 accuracy.
            xs = jnp.maximum(xs, -30.0)
            denom = 1.0 + jnp.exp(-xs)
            r = pl.reciprocal(denom, approx=True)
            p = r * (2.0 - denom * r)
            if masked:
                rid = lax.broadcasted_iota(jnp.int32, (c_rows, LANES), 0)
                cid = lax.broadcasted_iota(jnp.int32, (c_rows, LANES), 1)
                idx = base_elem + (row_off + rid) * LANES + cid
                keep = idx < valid_elems
                p = jnp.where(keep, p, 0.0)
                ts = jnp.where(keep, ts, 0.0)
            return fold8(p * ts, c_rows), fold8(p, c_rows), fold8(ts, c_rows)

        def tile_partials(masked):
            acc = (jnp.zeros((8, LANES), jnp.float32),) * 3
            if n_full > 0:
                def body(c, carry):
                    off = pl.multiple_of(c * chunk_rows, chunk_rows)
                    part = chunk_partials(off, chunk_rows, masked)
                    return tuple(a + b for a, b in zip(carry, part))
                acc = lax.fori_loop(0, n_full, body, acc, unroll=min(2, n_full))
            if rem_rows:
                part = chunk_partials(n_full * chunk_rows, rem_rows, masked)
                acc = tuple(a + b for a, b in zip(acc, part))
            return acc

        def accumulate(masked):
            inter, p_sum, t_sum = tile_partials(masked)
            o_ref[0, 0] += inter   # intersection partials
            o_ref[0, 1] += p_sum   # sigmoid(logits).sum() partials
            o_ref[0, 2] += t_sum   # targets.sum() partials

        if not needs_mask:
            accumulate(False)       # hot path: fully mask-free
        else:
            full_tile = base_elem + tile_elems <= valid_elems

            @pl.when(full_tile)
            def _():
                accumulate(False)

            @pl.when(jnp.logical_not(full_tile))
            def _():
                accumulate(True)    # ragged edge tile, host pad, or clamped duplicate tile

    return kernel


@functools.partial(jax.jit, static_argnames=("smooth", "block_rows"))
def dice_loss(logits, targets, smooth=1.0, block_rows=None):
    """Pallas equivalent of DiceLoss.forward. Returns a scalar f32."""
    total = logits.size

    # Sub-2-byte dtypes (bool / int8 masks) don't tile natively; upcast once (exact in bf16).
    if logits.dtype.itemsize < 2:
        logits = logits.astype(jnp.bfloat16)
    if targets.dtype.itemsize < 2:
        targets = targets.astype(jnp.bfloat16)

    if total % LANES == 0:
        # Common NCHW case: view the contiguous tensor as a lane-dense (rows, 128) slab
        # with a zero-copy (bitcast) reshape -- no pad, no prefix slice, native dtype.
        rows = total // LANES
        x2d = logits.reshape(rows, LANES)
        t2d = targets.reshape(rows, LANES)
    else:
        # Rare ragged case (size not a multiple of 128). Any rearrangement (pad or prefix
        # slice) is one extra copy in XLA; pad to whole (16,128) tiles and mask in-kernel.
        align = SUBLANE_ALIGN * LANES
        pad = align - total % align
        x2d = jnp.pad(logits.reshape(-1), (0, pad)).reshape(-1, LANES)
        t2d = jnp.pad(targets.reshape(-1), (0, pad)).reshape(-1, LANES)
        rows = x2d.shape[0]

    # Block size: ~TARGET_BLOCK_BYTES per input per grid step (8192 rows for f32, 16384
    # for bf16) so the fixed per-step pipeline overhead is <7% of the DMA time on all
    # generations; capped by the array itself for small inputs.
    itemsize = max(x2d.dtype.itemsize, t2d.dtype.itemsize)
    if block_rows is None:
        max_rows = TARGET_BLOCK_BYTES // (LANES * itemsize)
        max_rows = max(CHUNK_ROWS, (max_rows // CHUNK_ROWS) * CHUNK_ROWS)
    else:
        max_rows = block_rows          # test hook; must be a multiple of 16
    tile_rows = min(max_rows, rows)
    chunk_rows = min(CHUNK_ROWS, tile_rows)

    num_tiles = _cdiv(rows, tile_rows)
    num_slices = max(1, min(_num_tensorcores(), num_tiles))
    tiles_per_slice = _cdiv(num_tiles, num_slices)
    # Mask only if grid coverage exceeds the true element count (ragged edge tile, host
    # pad, or clamped duplicate tiles); the aligned hot path stays mask-free.
    needs_mask = num_slices * tiles_per_slice * tile_rows * LANES != total

    def in_map(s, j):
        # Clamp so every block start is in-bounds; clamped duplicate tiles are fully
        # masked inside the kernel.
        return (jnp.minimum(s * tiles_per_slice + j, num_tiles - 1), 0)

    kernel = _make_dice_kernel(tile_rows, chunk_rows, tiles_per_slice, total, needs_mask)

    in_bytes_per_step = tile_rows * LANES * (x2d.dtype.itemsize + t2d.dtype.itemsize)
    compiler_params = pltpu.CompilerParams(
        dimension_semantics=("parallel", "arbitrary"),
        # Double-buffered input blocks + chunk temporaries + headroom; well under v7x's
        # 64 MiB physical per-TC VMEM and v5e/v6e's 128 MiB.
        vmem_limit_bytes=int(min(2 * in_bytes_per_step + (16 << 20), 100 << 20)),
    )
    cost = pl.CostEstimate(
        flops=6 * total,
        transcendentals=2 * total,   # exp + reciprocal
        bytes_accessed=int(total * (x2d.dtype.itemsize + t2d.dtype.itemsize))
        + num_slices * 3 * 8 * LANES * 4,
    )

    partials = pl.pallas_call(
        kernel,
        out_shape=jax.ShapeDtypeStruct((num_slices, 3, 8, LANES), jnp.float32),
        grid_spec=pltpu.PrefetchScalarGridSpec(
            num_scalar_prefetch=0,
            grid=(num_slices, tiles_per_slice),
            in_specs=[
                pl.BlockSpec((tile_rows, LANES), in_map),
                pl.BlockSpec((tile_rows, LANES), in_map),
            ],
            out_specs=pl.BlockSpec((1, 3, 8, LANES), lambda s, j: (s, 0, 0, 0)),
        ),
        compiler_params=compiler_params,
        cost_estimate=cost,
    )(x2d, t2d)

    # Tiny finalize in the wrapper: cross-lane reduce the partial slabs + dice formula.
    sums = jnp.sum(partials, axis=(0, 2, 3))          # (3,)
    intersection, p_sum, t_sum = sums[0], sums[1], sums[2]
    dice = (2.0 * intersection + smooth) / (p_sum + t_sum + smooth)
    return (1.0 - dice).astype(jnp.float32)


def dice_loss_ref(logits, targets, smooth=1.0):
    """Pure-JAX reference matching the PyTorch forward exactly."""
    inputs = jax.nn.sigmoid(logits.astype(jnp.float32)).reshape(-1)
    tgt = targets.astype(jnp.float32).reshape(-1)
    intersection = jnp.sum(inputs * tgt)
    dice = (2.0 * intersection + smooth) / (jnp.sum(inputs) + jnp.sum(tgt) + smooth)
    return 1.0 - dice


if __name__ == "__main__":
    key = jax.random.PRNGKey(0)

    cases = [
        dict(shape=(2, 4, 16, 16)),                      # primary: one zero-copy (16,128) tile
        dict(shape=(2, 4, 96, 96)),                      # 576 rows: chunk loop + ragged 64-row chunk
        dict(shape=(1, 1, 32, 36)),                      # 9 rows: full-dim block + sub-8-row fold
        dict(shape=(2, 3, 17, 19)),                      # not 128-aligned: pad + in-kernel tail mask
        dict(shape=(2, 4, 40, 48), block_rows=64),       # multi-tile grid + masked edge tile
        dict(shape=(2, 4, 44, 48), block_rows=64),       # odd tile count: clamped duplicate tile
        dict(shape=(2, 4, 16, 16), dtype=jnp.bfloat16),  # bf16 logits, (16,128)-packed blocks
    ]

    for i, case in enumerate(cases):
        shape = case["shape"]
        dtype = case.get("dtype", jnp.float32)
        block_rows = case.get("block_rows")
        k1, k2 = jax.random.split(jax.random.fold_in(key, i))
        logits = jax.random.normal(k1, shape, dtype=jnp.float32).astype(dtype)
        targets = (jax.random.uniform(k2, shape) > 0.5).astype(jnp.float32)
        got = jax.block_until_ready(
            dice_loss(logits, targets, smooth=1.0, block_rows=block_rows))
        want = jax.block_until_ready(dice_loss_ref(logits, targets, smooth=1.0))
        # Tolerance covers the EUP approximate reciprocal (refined by one Newton step)
        # and the different f32 accumulation order of the lane-wise fold.
        assert jnp.allclose(got, want, atol=1e-4, rtol=1e-4), (shape, got, want)

    print("KERNEL_OK")
</pallas_src>

<mosaic_0001>
module attributes {stable_mosaic.version = 11 : i64} {
  func.func @kernel(%arg0: i32, %arg1: i32, %arg2: memref<16x128xf32, #tpu.memory_space<vmem>>, %arg3: memref<16x128xf32, #tpu.memory_space<vmem>>, %arg4: memref<1x3x8x128xf32, #tpu.memory_space<vmem>>) attributes {dimension_semantics = [#tpu.dimension_semantics<parallel>, #tpu.dimension_semantics<arbitrary>], iteration_bounds = array<i64: 1, 1>, scalar_prefetch = 0 : i64, scratch_operands = 0 : i64, tpu.core_type = #tpu.core_type<tc>, window_params = [{transform_indices = @transform_0, window_bounds = array<i64: 16, 128>}, {transform_indices = @transform_1, window_bounds = array<i64: 16, 128>}, {transform_indices = @transform_2, window_bounds = array<i64: 1, 3, 8, 128>}]} {
    %c0_i32 = arith.constant 0 : i32
    %0 = arith.cmpi eq, %arg1, %c0_i32 : i32
    %1 = arith.extui %0 : i1 to i32
    %c0_i32_0 = arith.constant 0 : i32
    %2 = arith.cmpi ne, %1, %c0_i32_0 : i32
    scf.if %2 {
      %cst_35 = arith.constant 0.000000e+00 : f32
      %56 = vector.broadcast %cst_35 : f32 to vector<1x3x8x128xf32>
      %c0_36 = arith.constant 0 : index
      %c0_37 = arith.constant 0 : index
      %c0_38 = arith.constant 0 : index
      %c0_39 = arith.constant 0 : index
      %57 = vector.load %arg4[%c0_36, %c0_37, %c0_38, %c0_39] : memref<1x3x8x128xf32, #tpu.memory_space<vmem>>, vector<1x3x8x128xf32>
      tpu.vector_store %arg4[%c0_36, %c0_37, %c0_38, %c0_39], %56 {strides = array<i32>} : memref<1x3x8x128xf32, #tpu.memory_space<vmem>>, vector<1x3x8x128xf32>,
    } else {
    }
    %cst = arith.constant 0.000000e+00 : f32
    %3 = vector.broadcast %cst : f32 to vector<8x128xf32>
    %c0_i32_1 = arith.constant 0 : i32
    %c16_i32 = arith.constant 16 : i32
    %4 = arith.muli %c0_i32_1, %c16_i32 : i32
    %5 = tpu.assume_multiple %4, 16 : i32
    %6 = arith.index_cast %5 : i32 to index
    %c0 = arith.constant 0 : index
    %7 = vector.load %arg2[%6, %c0] : memref<16x128xf32, #tpu.memory_space<vmem>>, vector<16x128xf32>
    %8 = arith.index_cast %5 : i32 to index
    %c0_2 = arith.constant 0 : index
    %9 = vector.load %arg3[%8, %c0_2] : memref<16x128xf32, #tpu.memory_space<vmem>>, vector<16x128xf32>
    %cst_3 = arith.constant -3.000000e+01 : f32
    %10 = vector.broadcast %cst_3 : f32 to vector<16x128xf32>
    %11 = arith.maximumf %7, %10 : vector<16x128xf32>
    %cst_4 = arith.constant 0.000000e+00 : f32
    %12 = vector.broadcast %cst_4 : f32 to vector<16x128xf32>
    %13 = arith.subf %12, %11 : vector<16x128xf32>
    %14 = math.exp %13 : vector<16x128xf32>
    %cst_5 = arith.constant 1.000000e+00 : f32
    %15 = vector.broadcast %cst_5 : f32 to vector<16x128xf32>
    %16 = arith.addf %15, %14 : vector<16x128xf32>
    %17 = tpu.reciprocal %16 {approx = true} : vector<16x128xf32> -> vector<16x128xf32>
    %18 = arith.mulf %16, %17 : vector<16x128xf32>
    %cst_6 = arith.constant 2.000000e+00 : f32
    %19 = vector.broadcast %cst_6 : f32 to vector<16x128xf32>
    %20 = arith.subf %19, %18 : vector<16x128xf32>
    %21 = arith.mulf %17, %20 : vector<16x128xf32>
    %22 = arith.mulf %21, %9 : vector<16x128xf32>
    %cst_7 = arith.constant 0.000000e+00 : f32
    %23 = vector.broadcast %cst_7 : f32 to vector<8x128xf32>
    %24 = vector.shape_cast %22 : vector<16x128xf32> to vector<2x8x128xf32>
    %cst_8 = arith.constant dense<0.000000e+00> : vector<8x128xf32>
    %25 = vector.multi_reduction <add>, %24, %cst_8 [0] : vector<2x8x128xf32> to vector<8x128xf32>
    %26 = arith.addf %23, %25 : vector<8x128xf32>
    %cst_9 = arith.constant 0.000000e+00 : f32
    %27 = vector.broadcast %cst_9 : f32 to vector<8x128xf32>
    %28 = vector.shape_cast %21 : vector<16x128xf32> to vector<2x8x128xf32>
    %cst_10 = arith.constant dense<0.000000e+00> : vector<8x128xf32>
    %29 = vector.multi_reduction <add>, %28, %cst_10 [0] : vector<2x8x128xf32> to vector<8x128xf32>
    %30 = arith.addf %27, %29 : vector<8x128xf32>
    %cst_11 = arith.constant 0.000000e+00 : f32
    %31 = vector.broadcast %cst_11 : f32 to vector<8x128xf32>
    %32 = vector.shape_cast %9 : vector<16x128xf32> to vector<2x8x128xf32>
    %cst_12 = arith.constant dense<0.000000e+00> : vector<8x128xf32>
    %33 = vector.multi_reduction <add>, %32, %cst_12 [0] : vector<2x8x128xf32> to vector<8x128xf32>
    %34 = arith.addf %31, %33 : vector<8x128xf32>
    %35 = arith.addf %3, %26 : vector<8x128xf32>
    %36 = arith.addf %3, %30 : vector<8x128xf32>
    %37 = arith.addf %3, %34 : vector<8x128xf32>
    %c1_i32 = arith.constant 1 : i32
    %c0_13 = arith.constant 0 : index
    %c0_14 = arith.constant 0 : index
    %c0_15 = arith.constant 0 : index
    %c0_16 = arith.constant 0 : index
    %38 = vector.load %arg4[%c0_13, %c0_14, %c0_15, %c0_16] : memref<1x3x8x128xf32, #tpu.memory_space<vmem>>, vector<1x1x8x128xf32>
    %39 = vector.shape_cast %38 : vector<1x1x8x128xf32> to vector<8x128xf32>
    %40 = arith.addf %39, %35 : vector<8x128xf32>
    %c0_17 = arith.constant 0 : index
    %c0_18 = arith.constant 0 : index
    %c0_19 = arith.constant 0 : index
    %c0_20 = arith.constant 0 : index
    %41 = vector.load %arg4[%c0_17, %c0_18, %c0_19, %c0_20] : memref<1x3x8x128xf32, #tpu.memory_space<vmem>>, vector<1x1x8x128xf32>
    %42 = vector.shape_cast %41 : vector<1x1x8x128xf32> to vector<8x128xf32>
    %43 = vector.shape_cast %40 : vector<8x128xf32> to vector<1x1x8x128xf32>
    tpu.vector_store %arg4[%c0_17, %c0_18, %c0_19, %c0_20], %43 {strides = array<i32>} : memref<1x3x8x128xf32, #tpu.memory_space<vmem>>, vector<1x1x8x128xf32>,
    %c0_21 = arith.constant 0 : index
    %c1 = arith.constant 1 : index
    %c0_22 = arith.constant 0 : index
    %c0_23 = arith.constant 0 : index
    %44 = vector.load %arg4[%c0_21, %c1, %c0_22, %c0_23] : memref<1x3x8x128xf32, #tpu.memory_space<vmem>>, vector<1x1x8x128xf32>
    %45 = vector.shape_cast %44 : vector<1x1x8x128xf32> to vector<8x128xf32>
    %46 = arith.addf %45, %36 : vector<8x128xf32>
    %c0_24 = arith.constant 0 : index
    %c1_25 = arith.constant 1 : index
    %c0_26 = arith.constant 0 : index
    %c0_27 = arith.constant 0 : index
    %47 = vector.load %arg4[%c0_24, %c1_25, %c0_26, %c0_27] : memref<1x3x8x128xf32, #tpu.memory_space<vmem>>, vector<1x1x8x128xf32>
    %48 = vector.shape_cast %47 : vector<1x1x8x128xf32> to vector<8x128xf32>
    %49 = vector.shape_cast %46 : vector<8x128xf32> to vector<1x1x8x128xf32>
    tpu.vector_store %arg4[%c0_24, %c1_25, %c0_26, %c0_27], %49 {strides = array<i32>} : memref<1x3x8x128xf32, #tpu.memory_space<vmem>>, vector<1x1x8x128xf32>,
    %c0_28 = arith.constant 0 : index
    %c2 = arith.constant 2 : index
    %c0_29 = arith.constant 0 : index
    %c0_30 = arith.constant 0 : index
    %50 = vector.load %arg4[%c0_28, %c2, %c0_29, %c0_30] : memref<1x3x8x128xf32, #tpu.memory_space<vmem>>, vector<1x1x8x128xf32>
    %51 = vector.shape_cast %50 : vector<1x1x8x128xf32> to vector<8x128xf32>
    %52 = arith.addf %51, %37 : vector<8x128xf32>
    %c0_31 = arith.constant 0 : index
    %c2_32 = arith.constant 2 : index
    %c0_33 = arith.constant 0 : index
    %c0_34 = arith.constant 0 : index
    %53 = vector.load %arg4[%c0_31, %c2_32, %c0_33, %c0_34] : memref<1x3x8x128xf32, #tpu.memory_space<vmem>>, vector<1x1x8x128xf32>
    %54 = vector.shape_cast %53 : vector<1x1x8x128xf32> to vector<8x128xf32>
    %55 = vector.shape_cast %52 : vector<8x128xf32> to vector<1x1x8x128xf32>
    tpu.vector_store %arg4[%c0_31, %c2_32, %c0_33, %c0_34], %55 {strides = array<i32>} : memref<1x3x8x128xf32, #tpu.memory_space<vmem>>, vector<1x1x8x128xf32>,
    return
  }
  func.func @transform_0(%arg0: i32, %arg1: i32) -> (i32, i32) {
    %c1_i32 = arith.constant 1 : i32
    %0 = arith.muli %arg0, %c1_i32 : i32
    %1 = arith.addi %0, %arg1 : i32
    %c0_i32 = arith.constant 0 : i32
    %2 = arith.minsi %1, %c0_i32 : i32
    %c0_i32_0 = arith.constant 0 : i32
    %c0_i32_1 = arith.constant 0 : i32
    return %2, %c0_i32_0 : i32, i32
  }
  func.func @transform_1(%arg0: i32, %arg1: i32) -> (i32, i32) {
    %c1_i32 = arith.constant 1 : i32
    %0 = arith.muli %arg0, %c1_i32 : i32
    %1 = arith.addi %0, %arg1 : i32
    %c0_i32 = arith.constant 0 : i32
    %2 = arith.minsi %1, %c0_i32 : i32
    %c0_i32_0 = arith.constant 0 : i32
    %c0_i32_1 = arith.constant 0 : i32
    return %2, %c0_i32_0 : i32, i32
  }
  func.func @transform_2(%arg0: i32, %arg1: i32) -> (i32, i32, i32, i32) {
    %c0_i32 = arith.constant 0 : i32
    %c0_i32_0 = arith.constant 0 : i32
    %c0_i32_1 = arith.constant 0 : i32
    %c0_i32_2 = arith.constant 0 : i32
    return %arg0, %c0_i32, %c0_i32_0, %c0_i32_1 : i32, i32, i32, i32
  }
}

</mosaic_0001>

<llo_original>
// kernel: dice_loss.1
$region0: #{dice_loss.1}
  #allocation0 [shape = 'u32[]', space=smem, size = 0x4, offset = 0x4, fixed_abs, tag = 'smem constant byte address 0x4 - core index']
  #allocation1 [shape = 'u32[144,128]{1,0:T(1,128)}', space=vmem, size = 0x12000, scoped, tag = 'internal scratch']
  %s0 = inlined_call_operand.vmem [shape: f32[16,128], index: 0, kind: input, shape index: {}]
  %s1 = inlined_call_operand.vmem [shape: f32[16,128], index: 1, kind: input, shape index: {}]
  %s2 = inlined_call_operand.vmem [shape: f32[1,3,8,128], index: 2, kind: output, shape index: {}]
  %s3 = sld [smem:[#allocation0]]
  $region22: #{dice_loss.1} parent=0
    _
  %s5 = ssub.s32 1, %s3
  %s6 = scalar_select 0, %s5, %s3
  // Predicated region
  $region2: #{dice_loss.1} parent=0 // pred_check
    _
  $region3: #{dice_loss.1} parent=0 // pred_check_branch
    %8 = sbr.rel (0) target = $region5
  $region4: #{dice_loss.1} parent=0 // pred_region
    %s9 = sadd.s32 0, 0
    %p10 = scmp.lt.s32.totalorder %s9, 0
    %s11 = scalar_select %p10, %s9, 0
    %s12 = smul.u32 2, %s11
    %p13 = scmp.lt.s32.totalorder %s12, 1
    %s14 = scalar_select %p13, %s12, 1
    %s15 = smul.addr %s14, 8
    %s16 = scalar_lea.vmem %s0, %s15
    %s17 = sadd.s32 0, 0
    %p18 = scmp.lt.s32.totalorder %s17, 0
    %s19 = scalar_select %p18, %s17, 0
    %s20 = smul.u32 2, %s19
  $region5: #{dice_loss.1} parent=0 // pred_fallthru
    _
  // Predicated region
  $region6: #{dice_loss.1} parent=0 // pred_check
    _
  $region7: #{dice_loss.1} parent=0 // pred_check_branch
    %22 = sbr.rel (0) target = $region9
  $region8: #{dice_loss.1} parent=0 // pred_region
    %s23 = sadd.s32 0, 0
    %p24 = scmp.lt.s32.totalorder %s23, 0
    %s25 = scalar_select %p24, %s23, 0
    %s26 = smul.u32 2, %s25
    %p27 = scmp.lt.s32.totalorder %s26, 1
    %s28 = scalar_select %p27, %s26, 1
    %s29 = smul.addr %s28, 8
    %s30 = scalar_lea.vmem %s1, %s29
    %s31 = sadd.s32 0, 0
    %p32 = scmp.lt.s32.totalorder %s31, 0
    %s33 = scalar_select %p32, %s31, 0
    %s34 = smul.u32 2, %s33
  $region9: #{dice_loss.1} parent=0 // pred_fallthru
    _
  %s35 = sadd.s32 0, 0
  %p36 = scmp.lt.s32.totalorder %s35, 0
  %s37 = scalar_select %p36, %s35, 0
  %s38 = smul.u32 2, %s37
  %p39 = scmp.lt.s32.totalorder %s38, 1
  %s40 = scalar_select %p39, %s38, 1
  %s41 = smul.addr %s40, 8
  %s42 = scalar_lea.vmem %s0, %s41
  %s43 = sadd.s32 0, 0
  %p44 = scmp.lt.s32.totalorder %s43, 0
  %s45 = scalar_select %p44, %s43, 0
  %s46 = smul.u32 2, %s45
  %p47 = scmp.lt.s32.totalorder %s46, 1
  %s48 = scalar_select %p47, %s46, 1
  %s49 = smul.addr %s48, 8
  %s50 = scalar_lea.vmem %s1, %s49
  %s51 = sadd.s32 0, 0
  %p52 = scmp.lt.s32.totalorder %s51, 0
  %s53 = scalar_select %p52, %s51, 0
  %s54 = smul.u32 2, %s53
  %p55 = scmp.lt.s32.totalorder %s54, 1
  %s56 = scalar_select %p55, %s54, 1
  %s57 = smul.addr %s56, 8
  %s58 = scalar_lea.vmem %s0, %s57
  %s59 = sadd.s32 0, 0
  %p60 = scmp.lt.s32.totalorder %s59, 0
  %s61 = scalar_select %p60, %s59, 0
  %s62 = smul.u32 2, %s61
  %s63 = sadd.s32 0, 0
  %p64 = scmp.lt.s32.totalorder %s63, 0
  %s65 = scalar_select %p64, %s63, 0
  %s66 = smul.u32 2, %s65
  %p67 = scmp.lt.s32.totalorder %s66, 1
  %s68 = scalar_select %p67, %s66, 1
  %s69 = smul.addr %s68, 8
  %s70 = scalar_lea.vmem %s1, %s69
  %s71 = sadd.s32 0, 0
  %p72 = scmp.lt.s32.totalorder %s71, 0
  %s73 = scalar_select %p72, %s71, 0
  %s74 = smul.u32 2, %s73
  %p75 = scmp.eq.s32.totalorder 0, 0
  // Predicated region
  $region10: #{dice_loss.1} parent=0 // pred_check
    %p76 = pneg %p75
  $region11: #{dice_loss.1} parent=0 // pred_check_branch
    %78 = sbr.rel (%p76) target = $region13
  $region12: #{dice_loss.1} parent=0 // pred_region
    %79 = vst [vmem:[%s2] sm:$0xff] 0.0
    %80 = vst [vmem:[%s2 + $0x8] sm:$0xff] 0.0
    %81 = vst [vmem:[%s2 + $0x10] sm:$0xff] 0.0
  $region13: #{dice_loss.1} parent=0 // pred_fallthru
    _
  %v82 = vld [vmem:[%s58] sm:$0xff]
  %v83 = vld [vmem:[%s58 + $0x8] sm:$0xff]
  %v84 = vld [vmem:[%s70] sm:$0xff]
  %v85 = vld [vmem:[%s70 + $0x8] sm:$0xff]
  %v86 = vmax.f32 %v82, -30.0
  %v87 = vmax.f32 %v83, -30.0
  %v88 = vsub.f32 0.0, %v86
  %v89 = vsub.f32 0.0, %v87
  %v90 = vmul.f32 %v88, 1.442695
  %v91 = vpow.pop %v90
  %v92 = vmul.f32 %v89, 1.442695
  %v93 = vpow.pop %v92
  %v94 = vadd.f32 %v91, 1.0
  %v95 = vadd.f32 %v93, 1.0
  %v96 = vrcp.pop %v94
  %v97 = vrcp.pop %v95
  %v98 = vmul.f32 %v94, %v96
  %v99 = vmul.f32 %v95, %v97
  %v100 = vsub.f32 2.0, %v98
  %v101 = vsub.f32 2.0, %v99
  %v102 = vmul.f32 %v96, %v100
  %v103 = vmul.f32 %v97, %v101
  %v104 = vmul.f32 %v102, %v84
  %v105 = vmul.f32 %v103, %v85
  %v106 = vadd.f32 %v104, %v105
  %v107 = vadd.f32 %v106, 0.0
  %v108 = vadd.f32 %v102, %v103
  %v109 = vadd.f32 %v108, 0.0
  %v110 = vadd.f32 %v84, %v85
  %v111 = vadd.f32 %v110, 0.0
  %v112 = vadd.f32 %v107, 0.0
  %v113 = vadd.f32 %v109, 0.0
  %v114 = vadd.f32 %v111, 0.0
  %v115 = vld [vmem:[%s2] sm:$0xff]
  %v116 = vadd.f32 %v115, %v112
  %117 = vst [vmem:[%s2] sm:$0xff] %v116
  %s118 = scalar_lea.vmem %s2, 8
  %v119 = vld [vmem:[%s118] sm:$0xff]
  %v120 = vadd.f32 %v119, %v113
  %121 = vst [vmem:[%s118] sm:$0xff] %v120
  %s122 = scalar_lea.vmem %s2, 16
  %v123 = vld [vmem:[%s122] sm:$0xff]
  %v124 = vadd.f32 %v123, %v114
  %125 = vst [vmem:[%s122] sm:$0xff] %v124
  // Predicated region
  $region14: #{dice_loss.1} parent=0 // pred_check
    _
  $region15: #{dice_loss.1} parent=0 // pred_check_branch
    %127 = sbr.rel (0) target = $region17
  $region16: #{dice_loss.1} parent=0 // pred_region
    _
  $region17: #{dice_loss.1} parent=0 // pred_fallthru
    _
  // Predicated region
  $region18: #{dice_loss.1} parent=0 // pred_check
    _
  $region19: #{dice_loss.1} parent=0 // pred_check_branch
    %129 = sbr.rel (0) target = $region21
  $region20: #{dice_loss.1} parent=0 // pred_region
    _
  $region21: #{dice_loss.1} parent=0 // pred_fallthru
    _

</llo_original>
